<compile_context>
chip_gen: v7x
topology: tpu7x:2x2x1
jax: 0.10.0
libtpu: 0.0.40
codegen_flags: <defaults>
</compile_context>

<pallas_src>
import functools

import jax
import jax.numpy as jnp
from jax.experimental import pallas as pl
from jax.experimental.pallas import tpu as pltpu


def _round_up(n, m):
    return ((n + m - 1) // m) * m


def _cdiv(a, b):
    return -(-a // b)


def policy_kernel(x_ref, w1_ref, b1_ref, w2_ref, b2_ref,
                  w3_ref, b3_ref, w4_ref, b4_ref, o_ref):
    """Full PolicyNet forward for one batch tile (dots in the weights' dtype,
    f32 accumulation, f32 elementwise)."""
    dot_dtype = w1_ref.dtype
    # fc1 + relu (x is cast in-kernel: keeps the HBM input f32, cast is free
    # on the VPU relative to the MXU work).
    h = jnp.dot(x_ref[...].astype(dot_dtype), w1_ref[...],
                preferred_element_type=jnp.float32)
    h = jnp.maximum(h + b1_ref[...], 0.0)
    # fc2 + relu
    h = jnp.dot(h.astype(dot_dtype), w2_ref[...],
                preferred_element_type=jnp.float32)
    h = jnp.maximum(h + b2_ref[...], 0.0)
    # fc3 + relu
    h = jnp.dot(h.astype(dot_dtype), w3_ref[...],
                preferred_element_type=jnp.float32)
    h = jnp.maximum(h + b3_ref[...], 0.0)
    # out + tanh (output block is the true (tile, act) shape -> tiny masked
    # store; no pad, no wrapper slice)
    h = jnp.dot(h.astype(dot_dtype), w4_ref[...],
                preferred_element_type=jnp.float32)
    o_ref[...] = jnp.tanh(h + b4_ref[...])


def _num_tensorcores_per_chip():
    """2 for v7x (parallel grid axes shard across its 2 TCs), else 1."""
    try:
        kind = jax.devices()[0].device_kind.lower()
    except Exception:  # pragma: no cover - defensive
        return 1
    return 2 if "7" in kind else 1


_MAX_TILE = 2048  # f32 (2048, 256) intermediate ~2 MiB: far under VMEM on all gens.


def _choose_batch_tile(B, n_cores):
    Bp = _round_up(max(B, 1), 8)
    if n_cores <= 1:
        # Single sequential TC (v5e/v6e): one grid step when the batch fits;
        # otherwise few large tiles to amortize the ~600-cycle step overhead.
        return min(Bp, _MAX_TILE)
    # 2 TCs (v7x): even step count so neither core idles, tiles up to 2048.
    steps = 2 * _cdiv(Bp, 2 * _MAX_TILE)
    return max(8, _round_up(_cdiv(Bp, steps), 8))


@functools.partial(jax.jit, static_argnames=("batch_tile",))
def _policy_forward_impl(x, prepared, *, batch_tile):
    w1, b1, w2, b2, w3, b3, w4, b4 = prepared
    B, obs = x.shape
    h1, h2, h3 = w1.shape[1], w2.shape[1], w3.shape[1]
    act = w4.shape[1]

    grid = (pl.cdiv(B, batch_tile),)

    # Advisory cost hint for XLA's scheduler (kernel FLOPs are tiny vs. its
    # launch footprint).
    flops = 2 * B * (obs * h1 + h1 * h2 + h2 * h3 + h3 * act)
    param_bytes = sum(int(a.size) * a.dtype.itemsize
                      for a in (w1, b1, w2, b2, w3, b3, w4, b4))
    bytes_accessed = B * obs * 4 + param_bytes + B * act * 4
    cost = pl.CostEstimate(flops=flops, transcendentals=B * act,
                           bytes_accessed=bytes_accessed)

    return pl.pallas_call(
        policy_kernel,
        out_shape=jax.ShapeDtypeStruct((B, act), jnp.float32),
        grid_spec=pltpu.PrefetchScalarGridSpec(
            num_scalar_prefetch=0,
            grid=grid,
            in_specs=[
                pl.BlockSpec((batch_tile, obs), lambda i: (i, 0)),  # x tile (f32)
                pl.BlockSpec((obs, h1), lambda i: (0, 0)),          # w1
                pl.BlockSpec((1, h1),   lambda i: (0, 0)),          # b1
                pl.BlockSpec((h1, h2),  lambda i: (0, 0)),          # w2
                pl.BlockSpec((1, h2),   lambda i: (0, 0)),          # b2
                pl.BlockSpec((h2, h3),  lambda i: (0, 0)),          # w3
                pl.BlockSpec((1, h3),   lambda i: (0, 0)),          # b3
                pl.BlockSpec((h3, act), lambda i: (0, 0)),          # w4
                pl.BlockSpec((1, act),  lambda i: (0, 0)),          # b4
            ],
            out_specs=pl.BlockSpec((batch_tile, act), lambda i: (i, 0)),
        ),
        compiler_params=pltpu.CompilerParams(
            dimension_semantics=("parallel",),
            vmem_limit_bytes=32 << 20,
        ),
        cost_estimate=cost,
    )(x, w1, b1, w2, b2, w3, b3, w4, b4)


def policy_forward(x, prepared, *, batch_tile=None):
    """Runs PolicyNet forward on TPU via Pallas.

    x: (B, observations) f32.
    prepared: output of `prepare_params` (weights as (in, out) in the compute
    dtype, biases as (1, out) f32).
    """
    if batch_tile is None:
        batch_tile = _choose_batch_tile(x.shape[0], _num_tensorcores_per_chip())
    else:
        batch_tile = _round_up(batch_tile, 8)
    return _policy_forward_impl(x, prepared, batch_tile=batch_tile)


def prepare_params(params, compute_dtype=jnp.bfloat16):
    """One-time parameter prep: weights -> compute dtype (bf16 default: native
    MXU dtype on v6e/v7x), biases -> f32 (elementwise math stays f32)."""
    w1, b1, w2, b2, w3, b3, w4, b4 = params
    return (w1.astype(compute_dtype), b1.astype(jnp.float32),
            w2.astype(compute_dtype), b2.astype(jnp.float32),
            w3.astype(compute_dtype), b3.astype(jnp.float32),
            w4.astype(compute_dtype), b4.astype(jnp.float32))


def init_params(key, observations, actions):
    """Deterministic init mimicking PyTorch Linear defaults:
    U(-1/sqrt(fan_in), 1/sqrt(fan_in)), weights stored as (in, out)."""
    dims = [(observations, 256), (256, 128), (128, 64), (64, actions)]
    params = []
    for (fan_in, fan_out) in dims:
        key, kw, kb = jax.random.split(key, 3)
        bound = 1.0 / jnp.sqrt(jnp.float32(fan_in))
        w = jax.random.uniform(kw, (fan_in, fan_out), jnp.float32,
                               minval=-bound, maxval=bound)
        b = jax.random.uniform(kb, (1, fan_out), jnp.float32,
                               minval=-bound, maxval=bound)
        params += [w, b]
    return tuple(params)


def reference_forward(x, params):
    w1, b1, w2, b2, w3, b3, w4, b4 = params
    h = jnp.maximum(x @ w1 + b1, 0.0)
    h = jnp.maximum(h @ w2 + b2, 0.0)
    h = jnp.maximum(h @ w3 + b3, 0.0)
    return jnp.tanh(h @ w4 + b4)


if __name__ == "__main__":
    key = jax.random.PRNGKey(0)
    key, kx = jax.random.split(key)

    observations, actions, batch = 16, 8, 2
    x = jax.random.normal(kx, (batch, observations), jnp.float32)
    params = init_params(key, observations, actions)

    ref = reference_forward(x, params)

    # f32 matmul path: tight match against the pure-JAX reference.
    prepared_f32 = prepare_params(params, compute_dtype=jnp.float32)
    out_f32 = jax.block_until_ready(policy_forward(x, prepared_f32))
    assert out_f32.shape == (batch, actions)
    assert jnp.allclose(out_f32, ref, atol=1e-5, rtol=1e-5)

    # Default bf16-matmul path (f32 accumulation + f32 elementwise).
    prepared_bf16 = prepare_params(params)
    out_bf16 = jax.block_until_ready(policy_forward(x, prepared_bf16))
    assert out_bf16.shape == (batch, actions)
    assert jnp.allclose(out_bf16, ref, atol=6e-2, rtol=6e-2)

    # Larger batch: exercises multi-row tiles and the masked ragged tail.
    key, kb = jax.random.split(key)
    xb = jax.random.normal(kb, (300, observations), jnp.float32)
    outb = jax.block_until_ready(policy_forward(xb, prepared_bf16))
    refb = reference_forward(xb, params)
    assert outb.shape == (300, actions)
    assert jnp.allclose(outb, refb, atol=6e-2, rtol=6e-2)

    # Explicit multi-step grid (forces >1 batch tile regardless of chip).
    outb2 = jax.block_until_ready(policy_forward(xb, prepared_bf16,
                                                 batch_tile=152))
    assert outb2.shape == (300, actions)
    assert jnp.allclose(outb2, refb, atol=6e-2, rtol=6e-2)

    print("KERNEL_OK")
</pallas_src>

<mosaic_0001>
module attributes {stable_mosaic.version = 11 : i64} {
  func.func @policy_kernel(%arg0: i32, %arg1: memref<8x16xf32, #tpu.memory_space<vmem>>, %arg2: memref<16x256xf32, #tpu.memory_space<vmem>>, %arg3: memref<1x256xf32, #tpu.memory_space<vmem>>, %arg4: memref<256x128xf32, #tpu.memory_space<vmem>>, %arg5: memref<1x128xf32, #tpu.memory_space<vmem>>, %arg6: memref<128x64xf32, #tpu.memory_space<vmem>>, %arg7: memref<1x64xf32, #tpu.memory_space<vmem>>, %arg8: memref<64x8xf32, #tpu.memory_space<vmem>>, %arg9: memref<1x8xf32, #tpu.memory_space<vmem>>, %arg10: memref<8x8xf32, #tpu.memory_space<vmem>>) attributes {dimension_semantics = [#tpu.dimension_semantics<parallel>], iteration_bounds = array<i64: 1>, scalar_prefetch = 0 : i64, scratch_operands = 0 : i64, tpu.core_type = #tpu.core_type<tc>, window_params = [{transform_indices = @transform_0, window_bounds = array<i64: 8, 16>}, {pipeline_mode = #tpu.pipeline_mode<synchronous>, transform_indices = @transform_1, window_bounds = array<i64: 16, 256>}, {pipeline_mode = #tpu.pipeline_mode<synchronous>, transform_indices = @transform_2, window_bounds = array<i64: 1, 256>}, {pipeline_mode = #tpu.pipeline_mode<synchronous>, transform_indices = @transform_3, window_bounds = array<i64: 256, 128>}, {pipeline_mode = #tpu.pipeline_mode<synchronous>, transform_indices = @transform_4, window_bounds = array<i64: 1, 128>}, {pipeline_mode = #tpu.pipeline_mode<synchronous>, transform_indices = @transform_5, window_bounds = array<i64: 128, 64>}, {pipeline_mode = #tpu.pipeline_mode<synchronous>, transform_indices = @transform_6, window_bounds = array<i64: 1, 64>}, {pipeline_mode = #tpu.pipeline_mode<synchronous>, transform_indices = @transform_7, window_bounds = array<i64: 64, 8>}, {pipeline_mode = #tpu.pipeline_mode<synchronous>, transform_indices = @transform_8, window_bounds = array<i64: 1, 8>}, {transform_indices = @transform_9, window_bounds = array<i64: 8, 8>}]} {
    %c0 = arith.constant 0 : index
    %c0_0 = arith.constant 0 : index
    %0 = vector.load %arg1[%c0, %c0_0] : memref<8x16xf32, #tpu.memory_space<vmem>>, vector<8x16xf32>
    %c0_1 = arith.constant 0 : index
    %c0_2 = arith.constant 0 : index
    %1 = vector.load %arg2[%c0_1, %c0_2] : memref<16x256xf32, #tpu.memory_space<vmem>>, vector<16x256xf32>
    %cst = arith.constant dense<0.000000e+00> : vector<8x256xf32>
    %2 = tpu.matmul %0, %1, %cst {dimension_numbers = #tpu.dot_dimension_numbers<[1], [0], [0], [1], [0, 0, 1, 1], [], []>} : vector<8x16xf32>, vector<16x256xf32>, vector<8x256xf32> -> vector<8x256xf32>
    %c0_3 = arith.constant 0 : index
    %c0_4 = arith.constant 0 : index
    %3 = vector.load %arg3[%c0_3, %c0_4] : memref<1x256xf32, #tpu.memory_space<vmem>>, vector<1x256xf32>
    %4 = vector.broadcast %3 : vector<1x256xf32> to vector<8x256xf32>
    %5 = arith.addf %2, %4 : vector<8x256xf32>
    %cst_5 = arith.constant 0.000000e+00 : f32
    %6 = vector.broadcast %cst_5 : f32 to vector<8x256xf32>
    %7 = arith.maximumf %5, %6 : vector<8x256xf32>
    %c0_6 = arith.constant 0 : index
    %c0_7 = arith.constant 0 : index
    %8 = vector.load %arg4[%c0_6, %c0_7] : memref<256x128xf32, #tpu.memory_space<vmem>>, vector<256x128xf32>
    %cst_8 = arith.constant dense<0.000000e+00> : vector<8x128xf32>
    %9 = tpu.matmul %7, %8, %cst_8 {dimension_numbers = #tpu.dot_dimension_numbers<[1], [0], [0], [1], [0, 0, 1, 1], [], []>} : vector<8x256xf32>, vector<256x128xf32>, vector<8x128xf32> -> vector<8x128xf32>
    %c0_9 = arith.constant 0 : index
    %c0_10 = arith.constant 0 : index
    %10 = vector.load %arg5[%c0_9, %c0_10] : memref<1x128xf32, #tpu.memory_space<vmem>>, vector<1x128xf32>
    %11 = vector.broadcast %10 : vector<1x128xf32> to vector<8x128xf32>
    %12 = arith.addf %9, %11 : vector<8x128xf32>
    %cst_11 = arith.constant 0.000000e+00 : f32
    %13 = vector.broadcast %cst_11 : f32 to vector<8x128xf32>
    %14 = arith.maximumf %12, %13 : vector<8x128xf32>
    %c0_12 = arith.constant 0 : index
    %c0_13 = arith.constant 0 : index
    %15 = vector.load %arg6[%c0_12, %c0_13] : memref<128x64xf32, #tpu.memory_space<vmem>>, vector<128x64xf32>
    %cst_14 = arith.constant dense<0.000000e+00> : vector<8x64xf32>
    %16 = tpu.matmul %14, %15, %cst_14 {dimension_numbers = #tpu.dot_dimension_numbers<[1], [0], [0], [1], [0, 0, 1, 1], [], []>} : vector<8x128xf32>, vector<128x64xf32>, vector<8x64xf32> -> vector<8x64xf32>
    %c0_15 = arith.constant 0 : index
    %c0_16 = arith.constant 0 : index
    %17 = vector.load %arg7[%c0_15, %c0_16] : memref<1x64xf32, #tpu.memory_space<vmem>>, vector<1x64xf32>
    %18 = vector.broadcast %17 : vector<1x64xf32> to vector<8x64xf32>
    %19 = arith.addf %16, %18 : vector<8x64xf32>
    %cst_17 = arith.constant 0.000000e+00 : f32
    %20 = vector.broadcast %cst_17 : f32 to vector<8x64xf32>
    %21 = arith.maximumf %19, %20 : vector<8x64xf32>
    %c0_18 = arith.constant 0 : index
    %c0_19 = arith.constant 0 : index
    %22 = vector.load %arg8[%c0_18, %c0_19] : memref<64x8xf32, #tpu.memory_space<vmem>>, vector<64x8xf32>
    %cst_20 = arith.constant dense<0.000000e+00> : vector<8x8xf32>
    %23 = tpu.matmul %21, %22, %cst_20 {dimension_numbers = #tpu.dot_dimension_numbers<[1], [0], [0], [1], [0, 0, 1, 1], [], []>} : vector<8x64xf32>, vector<64x8xf32>, vector<8x8xf32> -> vector<8x8xf32>
    %c0_21 = arith.constant 0 : index
    %c0_22 = arith.constant 0 : index
    %24 = vector.load %arg9[%c0_21, %c0_22] : memref<1x8xf32, #tpu.memory_space<vmem>>, vector<1x8xf32>
    %25 = vector.broadcast %24 : vector<1x8xf32> to vector<8x8xf32>
    %26 = arith.addf %23, %25 : vector<8x8xf32>
    %27 = math.tanh %26 : vector<8x8xf32>
    %c0_23 = arith.constant 0 : index
    %c0_24 = arith.constant 0 : index
    %28 = vector.load %arg10[%c0_23, %c0_24] : memref<8x8xf32, #tpu.memory_space<vmem>>, vector<8x8xf32>
    tpu.vector_store %arg10[%c0_23, %c0_24], %27 {strides = array<i32>} : memref<8x8xf32, #tpu.memory_space<vmem>>, vector<8x8xf32>,
    return
  }
  func.func @transform_0(%arg0: i32) -> (i32, i32) {
    %c0_i32 = arith.constant 0 : i32
    %c0_i32_0 = arith.constant 0 : i32
    return %arg0, %c0_i32 : i32, i32
  }
  func.func @transform_1(%arg0: i32) -> (i32, i32) {
    %c0_i32 = arith.constant 0 : i32
    %c0_i32_0 = arith.constant 0 : i32
    %c0_i32_1 = arith.constant 0 : i32
    return %c0_i32, %c0_i32_0 : i32, i32
  }
  func.func @transform_2(%arg0: i32) -> (i32, i32) {
    %c0_i32 = arith.constant 0 : i32
    %c0_i32_0 = arith.constant 0 : i32
    %c0_i32_1 = arith.constant 0 : i32
    return %c0_i32, %c0_i32_0 : i32, i32
  }
  func.func @transform_3(%arg0: i32) -> (i32, i32) {
    %c0_i32 = arith.constant 0 : i32
    %c0_i32_0 = arith.constant 0 : i32
    %c0_i32_1 = arith.constant 0 : i32
    return %c0_i32, %c0_i32_0 : i32, i32
  }
  func.func @transform_4(%arg0: i32) -> (i32, i32) {
    %c0_i32 = arith.constant 0 : i32
    %c0_i32_0 = arith.constant 0 : i32
    %c0_i32_1 = arith.constant 0 : i32
    return %c0_i32, %c0_i32_0 : i32, i32
  }
  func.func @transform_5(%arg0: i32) -> (i32, i32) {
    %c0_i32 = arith.constant 0 : i32
    %c0_i32_0 = arith.constant 0 : i32
    %c0_i32_1 = arith.constant 0 : i32
    return %c0_i32, %c0_i32_0 : i32, i32
  }
  func.func @transform_6(%arg0: i32) -> (i32, i32) {
    %c0_i32 = arith.constant 0 : i32
    %c0_i32_0 = arith.constant 0 : i32
    %c0_i32_1 = arith.constant 0 : i32
    return %c0_i32, %c0_i32_0 : i32, i32
  }
  func.func @transform_7(%arg0: i32) -> (i32, i32) {
    %c0_i32 = arith.constant 0 : i32
    %c0_i32_0 = arith.constant 0 : i32
    %c0_i32_1 = arith.constant 0 : i32
    return %c0_i32, %c0_i32_0 : i32, i32
  }
  func.func @transform_8(%arg0: i32) -> (i32, i32) {
    %c0_i32 = arith.constant 0 : i32
    %c0_i32_0 = arith.constant 0 : i32
    %c0_i32_1 = arith.constant 0 : i32
    return %c0_i32, %c0_i32_0 : i32, i32
  }
  func.func @transform_9(%arg0: i32) -> (i32, i32) {
    %c0_i32 = arith.constant 0 : i32
    %c0_i32_0 = arith.constant 0 : i32
    return %arg0, %c0_i32 : i32, i32
  }
}

</mosaic_0001>

<llo_original>
// kernel: _policy_forward_impl.1
$region0: #{_policy_forward_impl.1}
  #allocation0 [shape = 'u32[]', space=smem, size = 0x4, offset = 0x4, fixed_abs, tag = 'smem constant byte address 0x4 - core index']
  #allocation1 [shape = 'u32[144,128]{1,0:T(1,128)}', space=vmem, size = 0x12000, scoped, tag = 'internal scratch']
  %s0 = inlined_call_operand.vmem [shape: f32[2,16], index: 0, kind: input, shape index: {}]
  %s1 = inlined_call_operand.hbm [shape: f32[16,256], index: 1, kind: input, shape index: {}]
  %s2 = inlined_call_operand.vmem [shape: f32[1,256], index: 2, kind: input, shape index: {}]
  %s3 = inlined_call_operand.vmem [shape: f32[256,128], index: 3, kind: input, shape index: {}]
  %s4 = inlined_call_operand.vmem [shape: f32[1,128], index: 4, kind: input, shape index: {}]
  %s5 = inlined_call_operand.vmem [shape: f32[128,64], index: 5, kind: input, shape index: {}]
  %s6 = inlined_call_operand.vmem [shape: f32[1,64], index: 6, kind: input, shape index: {}]
  %s7 = inlined_call_operand.vmem [shape: f32[64,8], index: 7, kind: input, shape index: {}]
  %s8 = inlined_call_operand.vmem [shape: f32[1,8], index: 8, kind: input, shape index: {}]
  %s9 = inlined_call_operand.hbm [shape: f32[2,8], index: 9, kind: output, shape index: {}]
  %s10 = sld [smem:[#allocation0]]
  $region50: #{_policy_forward_impl.1} parent=0
    _
  %s12 = ssub.s32 1, %s10
  %s13 = scalar_select 0, %s12, %s10
  $region1: #{_policy_forward_impl.1} parent=0
    #allocation2 [shape = 'u8[16384]{0}', space=vmem, size = 0x4000, scoped, tag = 'input window, operand 1, single buffered']
    #allocation3 [shape = 's32[1]{0}', space=sflag, size = 0x4, scoped, tag = 'scoped memory for _policy_forward_impl.1']
    #allocation4 [shape = 's32[1]{0}', space=sflag, size = 0x4, scoped, tag = 'scoped memory for _policy_forward_impl.1']
    #allocation5 [shape = 'u8[4096]{0}', space=vmem, size = 0x1000, scoped, tag = 'output window, operand 0, single buffered']
    %14 = vsyncpa [#allocation3], 0
    %15 = vsyncpa [#allocation4], 0
    // Predicated region
    $region2: #{_policy_forward_impl.1} parent=1 // pred_check
      _
    $region3: #{_policy_forward_impl.1} parent=1 // pred_check_branch
      %17 = sbr.rel (0) target = $region5
    $region4: #{_policy_forward_impl.1} parent=1 // pred_region
      _
    $region5: #{_policy_forward_impl.1} parent=1 // pred_fallthru
      _
    // Predicated region
    $region6: #{_policy_forward_impl.1} parent=1 // pred_check
      _
    $region7: #{_policy_forward_impl.1} parent=1 // pred_check_branch
      %19 = sbr.rel (0) target = $region9
    $region8: #{_policy_forward_impl.1} parent=1 // pred_region
      %s21 = ssub.s32 512, 512
      %22 = vsyncadd [#allocation3], %s21
      %s23 = sshll.u32 [#allocation2], 4
      %s24 = int_to_ptr.vmem [resolvable:$true] %s23
      %29 = dma.hbm_to_vmem [thread:$0]  %s1, 512, %s24, [#allocation3], 256, 256, 16
    $region9: #{_policy_forward_impl.1} parent=1 // pred_fallthru
      _
    // Predicated region
    $region10: #{_policy_forward_impl.1} parent=1 // pred_check
      _
    $region11: #{_policy_forward_impl.1} parent=1 // pred_check_branch
      %31 = sbr.rel (0) target = $region13
    $region12: #{_policy_forward_impl.1} parent=1 // pred_region
      _
    $region13: #{_policy_forward_impl.1} parent=1 // pred_fallthru
      _
    // Predicated region
    $region14: #{_policy_forward_impl.1} parent=1 // pred_check
      _
    $region15: #{_policy_forward_impl.1} parent=1 // pred_check_branch
      %33 = sbr.rel (0) target = $region17
    $region16: #{_policy_forward_impl.1} parent=1 // pred_region
      _
    $region17: #{_policy_forward_impl.1} parent=1 // pred_fallthru
      _
    // Predicated region
    $region18: #{_policy_forward_impl.1} parent=1 // pred_check
      _
    $region19: #{_policy_forward_impl.1} parent=1 // pred_check_branch
      %35 = sbr.rel (0) target = $region21
    $region20: #{_policy_forward_impl.1} parent=1 // pred_region
      _
    $region21: #{_policy_forward_impl.1} parent=1 // pred_fallthru
      _
    // Predicated region
    $region22: #{_policy_forward_impl.1} parent=1 // pred_check
      _
    $region23: #{_policy_forward_impl.1} parent=1 // pred_check_branch
      %37 = sbr.rel (0) target = $region25
    $region24: #{_policy_forward_impl.1} parent=1 // pred_region
      _
    $region25: #{_policy_forward_impl.1} parent=1 // pred_fallthru
      _
    // Predicated region
    $region26: #{_policy_forward_impl.1} parent=1 // pred_check
      _
    $region27: #{_policy_forward_impl.1} parent=1 // pred_check_branch
      %39 = sbr.rel (0) target = $region29
    $region28: #{_policy_forward_impl.1} parent=1 // pred_region
      _
    $region29: #{_policy_forward_impl.1} parent=1 // pred_fallthru
      _
    // Predicated region
    $region30: #{_policy_forward_impl.1} parent=1 // pred_check
      _
    $region31: #{_policy_forward_impl.1} parent=1 // pred_check_branch
      %41 = sbr.rel (0) target = $region33
    $region32: #{_policy_forward_impl.1} parent=1 // pred_region
      _
    $region33: #{_policy_forward_impl.1} parent=1 // pred_fallthru
      _
    // Predicated region
    $region34: #{_policy_forward_impl.1} parent=1 // pred_check
      _
    $region35: #{_policy_forward_impl.1} parent=1 // pred_check_branch
      %43 = sbr.rel (0) target = $region37
    $region36: #{_policy_forward_impl.1} parent=1 // pred_region
      _
    $region37: #{_policy_forward_impl.1} parent=1 // pred_fallthru
      _
    // Predicated region
    $region38: #{_policy_forward_impl.1} parent=1 // pred_check
      _
    $region39: #{_policy_forward_impl.1} parent=1 // pred_check_branch
      %45 = sbr.rel (0) target = $region41
    $region40: #{_policy_forward_impl.1} parent=1 // pred_region
      %46 = dma.done [#allocation3], 512
    $region41: #{_policy_forward_impl.1} parent=1 // pred_fallthru
      _
    %v47 = vld [vmem:[%s0] sm:$0xff]
    %v48 = vld [vmem:[#allocation2] sm:$0xff]
    %v49 = vld [vmem:[#allocation2 + $0x8] sm:$0xff]
    %v50 = vld [vmem:[#allocation2 + $0x10] sm:$0xff]
    %v51 = vld [vmem:[#allocation2 + $0x18] sm:$0xff]
    %v52 = vld [vmem:[%s2] sm:$0x3]
    %v54 = vlaneseq
    %v55 = vshrl.u32 %v54, 7
    %v56 = vsub.s32 0, %v55
    %v57 = vrot.slane %v52, %v56
    %v58 = vlaneseq
    %v59 = vshrl.u32 %v58, 7
    %v60 = vsub.s32 1, %v59
    %v61 = vrot.slane %v52, %v60
    %vm64 = vcmask 130048
    %v66 = vsel %vm64, %v47, 0
    %68 = vmatprep.subr.mxu0 %v49
    %69 = vmatpush1.msra.mxu0 %v48
    %70 = vmatprep.subr.mxu0 %v51
    %71 = vmatpush1.msra.mxu0 %v50
    %72 = vmatprep.subr.mxu0 0.0
    %73 = vmatpush1.msra.mxu0 0.0
    %74 = vmatprep.subr.mxu0 0.0
    %75 = vmatpush1.msra.mxu0 0.0
    %76 = vmatprep.subr.mxu0 0.0
    %77 = vmatpush1.msra.mxu0 0.0
    %78 = vmatprep.subr.mxu0 0.0
    %79 = vmatpush1.msra.mxu0 0.0
    %80 = vmatprep.subr.mxu0 0.0
    %81 = vmatpush1.msra.mxu0 0.0
    %82 = vmatprep.subr.mxu0 0.0
    %83 = vmatpush1.msra.mxu0 0.0
    %84 = vmatprep.subr.mxu0 0.0
    %85 = vmatpush1.msra.mxu0 0.0
    %86 = vmatprep.subr.mxu0 0.0
    %87 = vmatpush1.msra.mxu0 0.0
    %88 = vmatprep.subr.mxu0 0.0
    %89 = vmatpush1.msra.mxu0 0.0
    %90 = vmatprep.subr.mxu0 0.0
    %91 = vmatpush1.msra.mxu0 0.0
    %92 = vmatprep.subr.mxu0 0.0
    %93 = vmatpush1.msra.mxu0 0.0
    %94 = vmatprep.subr.mxu0 0.0
    %95 = vmatpush1.msra.mxu0 0.0
    %96 = vmatprep.subr.mxu0 0.0
    %97 = vmatpush1.msra.mxu0 0.0
    %98 = vmatprep.subr.mxu0 0.0
    %99 = vmatpush1.msra.mxu0 0.0
    %100 = vmatprep.subr.mxu0 0.0
    %101 = vmatpush1.msra.mxu0 0.0
    %102 = vmatprep.subr.mxu0 0.0
    %103 = vmatpush1.msra.mxu0 0.0
    %104 = vmatprep.subr.mxu0 0.0
    %105 = vmatpush1.msra.mxu0 0.0
    %106 = vmatprep.subr.mxu0 0.0
    %107 = vmatpush1.msra.mxu0 0.0
    %108 = vmatprep.subr.mxu0 0.0
    %109 = vmatpush1.msra.mxu0 0.0
    %110 = vmatprep.subr.mxu0 0.0
    %111 = vmatpush1.msra.mxu0 0.0
    %112 = vmatprep.subr.mxu0 0.0
    %113 = vmatpush1.msra.mxu0 0.0
    %114 = vmatprep.subr.mxu0 0.0
    %115 = vmatpush1.msra.mxu0 0.0
    %116 = vmatprep.subr.mxu0 0.0
    %117 = vmatpush1.msra.mxu0 0.0
    %118 = vmatprep.subr.mxu0 0.0
    %119 = vmatpush1.msra.mxu0 0.0
    %120 = vmatprep.subr.mxu0 0.0
    %121 = vmatpush1.msra.mxu0 0.0
    %122 = vmatprep.subr.mxu0 0.0
    %123 = vmatpush1.msra.mxu0 0.0
    %124 = vmatprep.subr.mxu0 0.0
    %125 = vmatpush1.msra.mxu0 0.0
    %126 = vmatprep.subr.mxu0 0.0
    %127 = vmatpush1.msra.mxu0 0.0
    %128 = vmatprep.subr.mxu0 0.0
    %129 = vmatpush1.msra.mxu0 0.0
    %130 = vmatprep.subr.mxu0 0.0
    %131 = vmatpush1.msra.mxu0 0.0
    %132 = vmatprep.mubr.f32.mxu0 0.0
    %133 = vmatmul.mubr.f32.gmra.mrb[0].mxu0 %v66
    %v134 = vpop.f32.mrb[0].mxu0
    %v135 = vadd.f32 %v57, %v134
    %v136 = vpop.f32.mrb[0].mxu0
    %v137 = vadd.f32 %v61, %v136
    %138 = vdwg.mxu0
    %v139 = vmax.f32 %v135, 0.0
    %v140 = vmax.f32 %v137, 0.0
    %v141 = vld [vmem:[%s3] sm:$0xff]
    %v142 = vld [vmem:[%s3 + $0x8] sm:$0xff]
    %v143 = vld [vmem:[%s3 + $0x10] sm:$0xff]
    %v144 = vld [vmem:[%s3 + $0x18] sm:$0xff]
    %v145 = vld [vmem:[%s3 + $0x20] sm:$0xff]
    %v146 = vld [vmem:[%s3 + $0x28] sm:$0xff]
    %v147 = vld [vmem:[%s3 + $0x30] sm:$0xff]
    %v148 = vld [vmem:[%s3 + $0x38] sm:$0xff]
    %v149 = vld [vmem:[%s3 + $0x40] sm:$0xff]
    %v150 = vld [vmem:[%s3 + $0x48] sm:$0xff]
    %v151 = vld [vmem:[%s3 + $0x50] sm:$0xff]
    %v152 = vld [vmem:[%s3 + $0x58] sm:$0xff]
    %v153 = vld [vmem:[%s3 + $0x60] sm:$0xff]
    %v154 = vld [vmem:[%s3 + $0x68] sm:$0xff]
    %v155 = vld [vmem:[%s3 + $0x70] sm:$0xff]
    %v156 = vld [vmem:[%s3 + $0x78] sm:$0xff]
    %v157 = vld [vmem:[%s3 + $0x80] sm:$0xff]
    %v158 = vld [vmem:[%s3 + $0x88] sm:$0xff]
    %v159 = vld [vmem:[%s3 + $0x90] sm:$0xff]
    %v160 = vld [vmem:[%s3 + $0x98] sm:$0xff]
    %v161 = vld [vmem:[%s3 + $0xa0] sm:$0xff]
    %v162 = vld [vmem:[%s3 + $0xa8] sm:$0xff]
    %v163 = vld [vmem:[%s3 + $0xb0] sm:$0xff]
    %v164 = vld [vmem:[%s3 + $0xb8] sm:$0xff]
    %v165 = vld [vmem:[%s3 + $0xc0] sm:$0xff]
    %v166 = vld [vmem:[%s3 + $0xc8] sm:$0xff]
    %v167 = vld [vmem:[%s3 + $0xd0] sm:$0xff]
    %v168 = vld [vmem:[%s3 + $0xd8] sm:$0xff]
    %v169 = vld [vmem:[%s3 + $0xe0] sm:$0xff]
    %v170 = vld [vmem:[%s3 + $0xe8] sm:$0xff]
    %v171 = vld [vmem:[%s3 + $0xf0] sm:$0xff]
    %v172 = vld [vmem:[%s3 + $0xf8] sm:$0xff]
    %v173 = vld [vmem:[%s4] sm:$0x1]
    %v175 = vlaneseq
    %v176 = vshrl.u32 %v175, 7
    %v177 = vsub.s32 0, %v176
    %v178 = vrot.slane %v173, %v177
    %180 = vmatprep.subr.mxu0 0.0
    %181 = vmatpush1.msra.mxu0 %v141
    %182 = vmatprep.subr.mxu0 0.0
    %183 = vmatpush1.msra.mxu0 %v142
    %184 = vmatprep.subr.mxu0 0.0
    %185 = vmatpush1.msra.mxu0 %v143
    %186 = vmatprep.subr.mxu0 0.0
    %187 = vmatpush1.msra.mxu0 %v144
    %188 = vmatprep.subr.mxu0 0.0
    %189 = vmatpush1.msra.mxu0 %v145
    %190 = vmatprep.subr.mxu0 0.0
    %191 = vmatpush1.msra.mxu0 %v146
    %192 = vmatprep.subr.mxu0 0.0
    %193 = vmatpush1.msra.mxu0 %v147
    %194 = vmatprep.subr.mxu0 0.0
    %195 = vmatpush1.msra.mxu0 %v148
    %196 = vmatprep.subr.mxu0 0.0
    %197 = vmatpush1.msra.mxu0 %v149
    %198 = vmatprep.subr.mxu0 0.0
    %199 = vmatpush1.msra.mxu0 %v150
    %200 = vmatprep.subr.mxu0 0.0
    %201 = vmatpush1.msra.mxu0 %v151
    %202 = vmatprep.subr.mxu0 0.0
    %203 = vmatpush1.msra.mxu0 %v152
    %204 = vmatprep.subr.mxu0 0.0
    %205 = vmatpush1.msra.mxu0 %v153
    %206 = vmatprep.subr.mxu0 0.0
    %207 = vmatpush1.msra.mxu0 %v154
    %208 = vmatprep.subr.mxu0 0.0
    %209 = vmatpush1.msra.mxu0 %v155
    %210 = vmatprep.subr.mxu0 0.0
    %211 = vmatpush1.msra.mxu0 %v156
    %212 = vmatprep.subr.mxu0 0.0
    %213 = vmatpush1.msra.mxu0 %v157
    %214 = vmatprep.subr.mxu0 0.0
    %215 = vmatpush1.msra.mxu0 %v158
    %216 = vmatprep.subr.mxu0 0.0
    %217 = vmatpush1.msra.mxu0 %v159
    %218 = vmatprep.subr.mxu0 0.0
    %219 = vmatpush1.msra.mxu0 %v160
    %220 = vmatprep.subr.mxu0 0.0
    %221 = vmatpush1.msra.mxu0 %v161
    %222 = vmatprep.subr.mxu0 0.0
    %223 = vmatpush1.msra.mxu0 %v162
    %224 = vmatprep.subr.mxu0 0.0
    %225 = vmatpush1.msra.mxu0 %v163
    %226 = vmatprep.subr.mxu0 0.0
    %227 = vmatpush1.msra.mxu0 %v164
    %228 = vmatprep.subr.mxu0 0.0
    %229 = vmatpush1.msra.mxu0 %v165
    %230 = vmatprep.subr.mxu0 0.0
    %231 = vmatpush1.msra.mxu0 %v166
    %232 = vmatprep.subr.mxu0 0.0
    %233 = vmatpush1.msra.mxu0 %v167
    %234 = vmatprep.subr.mxu0 0.0
    %235 = vmatpush1.msra.mxu0 %v168
    %236 = vmatprep.subr.mxu0 0.0
    %237 = vmatpush1.msra.mxu0 %v169
    %238 = vmatprep.subr.mxu0 0.0
    %239 = vmatpush1.msra.mxu0 %v170
    %240 = vmatprep.subr.mxu0 0.0
    %241 = vmatpush1.msra.mxu0 %v171
    %242 = vmatprep.subr.mxu0 0.0
    %243 = vmatpush1.msra.mxu0 %v172
    %244 = vmatprep.mubr.f32.mxu0 %v140
    %245 = vmatmul.mubr.f32.gmra.mrb[0].mxu0 %v139
    %v246 = vpop.f32.mrb[0].mxu0
    %v247 = vadd.f32 %v178, %v246
    %v248 = vpop.f32.mrb[0].mxu0
    %249 = vdwg.mxu0
    %v250 = vmax.f32 %v247, 0.0
    %v251 = vld [vmem:[%s5] sm:$0xff]
    %v252 = vld [vmem:[%s5 + $0x8] sm:$0xff]
    %v253 = vld [vmem:[%s5 + $0x10] sm:$0xff]
    %v254 = vld [vmem:[%s5 + $0x18] sm:$0xff]
    %v255 = vld [vmem:[%s5 + $0x20] sm:$0xff]
    %v256 = vld [vmem:[%s5 + $0x28] sm:$0xff]
    %v257 = vld [vmem:[%s5 + $0x30] sm:$0xff]
    %v258 = vld [vmem:[%s5 + $0x38] sm:$0xff]
    %v259 = vld [vmem:[%s5 + $0x40] sm:$0xff]
    %v260 = vld [vmem:[%s5 + $0x48] sm:$0xff]
    %v261 = vld [vmem:[%s5 + $0x50] sm:$0xff]
    %v262 = vld [vmem:[%s5 + $0x58] sm:$0xff]
    %v263 = vld [vmem:[%s5 + $0x60] sm:$0xff]
    %v264 = vld [vmem:[%s5 + $0x68] sm:$0xff]
    %v265 = vld [vmem:[%s5 + $0x70] sm:$0xff]
    %v266 = vld [vmem:[%s5 + $0x78] sm:$0xff]
    %v267 = vld [vmem:[%s6] sm:$0x1]
    %v269 = vlaneseq
    %v270 = vshrl.u32 %v269, 7
    %v271 = vsub.s32 0, %v270
    %v272 = vrot.slane %v267, %v271
    %274 = vmatprep.subr.mxu0 0.0
    %275 = vmatpush1.msra.mxu0 %v251
    %276 = vmatprep.subr.mxu0 0.0
    %277 = vmatpush1.msra.mxu0 %v252
    %278 = vmatprep.subr.mxu0 0.0
    %279 = vmatpush1.msra.mxu0 %v253
    %280 = vmatprep.subr.mxu0 0.0
    %281 = vmatpush1.msra.mxu0 %v254
    %282 = vmatprep.subr.mxu0 0.0
    %283 = vmatpush1.msra.mxu0 %v255
    %284 = vmatprep.subr.mxu0 0.0
    %285 = vmatpush1.msra.mxu0 %v256
    %286 = vmatprep.subr.mxu0 0.0
    %287 = vmatpush1.msra.mxu0 %v257
    %288 = vmatprep.subr.mxu0 0.0
    %289 = vmatpush1.msra.mxu0 %v258
    %290 = vmatprep.subr.mxu0 0.0
    %291 = vmatpush1.msra.mxu0 %v259
    %292 = vmatprep.subr.mxu0 0.0
    %293 = vmatpush1.msra.mxu0 %v260
    %294 = vmatprep.subr.mxu0 0.0
    %295 = vmatpush1.msra.mxu0 %v261
    %296 = vmatprep.subr.mxu0 0.0
    %297 = vmatpush1.msra.mxu0 %v262
    %298 = vmatprep.subr.mxu0 0.0
    %299 = vmatpush1.msra.mxu0 %v263
    %300 = vmatprep.subr.mxu0 0.0
    %301 = vmatpush1.msra.mxu0 %v264
    %302 = vmatprep.subr.mxu0 0.0
    %303 = vmatpush1.msra.mxu0 %v265
    %304 = vmatprep.subr.mxu0 0.0
    %305 = vmatpush1.msra.mxu0 %v266
    %306 = vmatprep.subr.mxu0 0.0
    %307 = vmatpush1.msra.mxu0 0.0
    %308 = vmatprep.subr.mxu0 0.0
    %309 = vmatpush1.msra.mxu0 0.0
    %310 = vmatprep.subr.mxu0 0.0
    %311 = vmatpush1.msra.mxu0 0.0
    %312 = vmatprep.subr.mxu0 0.0
    %313 = vmatpush1.msra.mxu0 0.0
    %314 = vmatprep.subr.mxu0 0.0
    %315 = vmatpush1.msra.mxu0 0.0
    %316 = vmatprep.subr.mxu0 0.0
    %317 = vmatpush1.msra.mxu0 0.0
    %318 = vmatprep.subr.mxu0 0.0
    %319 = vmatpush1.msra.mxu0 0.0
    %320 = vmatprep.subr.mxu0 0.0
    %321 = vmatpush1.msra.mxu0 0.0
    %322 = vmatprep.subr.mxu0 0.0
    %323 = vmatpush1.msra.mxu0 0.0
    %324 = vmatprep.subr.mxu0 0.0
    %325 = vmatpush1.msra.mxu0 0.0
    %326 = vmatprep.subr.mxu0 0.0
    %327 = vmatpush1.msra.mxu0 0.0
    %328 = vmatprep.subr.mxu0 0.0
    %329 = vmatpush1.msra.mxu0 0.0
    %330 = vmatprep.subr.mxu0 0.0
    %331 = vmatpush1.msra.mxu0 0.0
    %332 = vmatprep.subr.mxu0 0.0
    %333 = vmatpush1.msra.mxu0 0.0
    %334 = vmatprep.subr.mxu0 0.0
    %335 = vmatpush1.msra.mxu0 0.0
    %336 = vmatprep.subr.mxu0 0.0
    %337 = vmatpush1.msra.mxu0 0.0
    %338 = vmatprep.mubr.f32.mxu0 0.0
    %339 = vmatmul.mubr.f32.gmra.mrb[0].mxu0 %v250
    %v340 = vpop.f32.mrb[0].mxu0
    %v341 = vadd.f32 %v272, %v340
    %v342 = vpop.f32.mrb[0].mxu0
    %343 = vdwg.mxu0
    %v344 = vmax.f32 %v341, 0.0
    %v345 = vld [vmem:[%s7] sm:$0xff]
    %v346 = vld [vmem:[%s7 + $0x8] sm:$0xff]
    %v347 = vld [vmem:[%s7 + $0x10] sm:$0xff]
    %v348 = vld [vmem:[%s7 + $0x18] sm:$0xff]
    %v349 = vld [vmem:[%s7 + $0x20] sm:$0xff]
    %v350 = vld [vmem:[%s7 + $0x28] sm:$0xff]
    %v351 = vld [vmem:[%s7 + $0x30] sm:$0xff]
    %v352 = vld [vmem:[%s7 + $0x38] sm:$0xff]
    %v353 = vld [vmem:[%s8] sm:$0x1]
    %v355 = vlaneseq
    %v356 = vshrl.u32 %v355, 7
    %v357 = vsub.s32 0, %v356
    %v358 = vrot.slane %v353, %v357
    %vm360 = vcmask 523264
    %v362 = vsel %vm360, %v344, 0
    %364 = vmatprep.subr.mxu0 0.0
    %365 = vmatpush1.msra.mxu0 %v345
    %366 = vmatprep.subr.mxu0 0.0
    %367 = vmatpush1.msra.mxu0 %v346
    %368 = vmatprep.subr.mxu0 0.0
    %369 = vmatpush1.msra.mxu0 %v347
    %370 = vmatprep.subr.mxu0 0.0
    %371 = vmatpush1.msra.mxu0 %v348
    %372 = vmatprep.subr.mxu0 0.0
    %373 = vmatpush1.msra.mxu0 %v349
    %374 = vmatprep.subr.mxu0 0.0
    %375 = vmatpush1.msra.mxu0 %v350
    %376 = vmatprep.subr.mxu0 0.0
    %377 = vmatpush1.msra.mxu0 %v351
    %378 = vmatprep.subr.mxu0 0.0
    %379 = vmatpush1.msra.mxu0 %v352
    %380 = vmatprep.subr.mxu0 0.0
    %381 = vmatpush1.msra.mxu0 0.0
    %382 = vmatprep.subr.mxu0 0.0
    %383 = vmatpush1.msra.mxu0 0.0
    %384 = vmatprep.subr.mxu0 0.0
    %385 = vmatpush1.msra.mxu0 0.0
    %386 = vmatprep.subr.mxu0 0.0
    %387 = vmatpush1.msra.mxu0 0.0
    %388 = vmatprep.subr.mxu0 0.0
    %389 = vmatpush1.msra.mxu0 0.0
    %390 = vmatprep.subr.mxu0 0.0
    %391 = vmatpush1.msra.mxu0 0.0
    %392 = vmatprep.subr.mxu0 0.0
    %393 = vmatpush1.msra.mxu0 0.0
    %394 = vmatprep.subr.mxu0 0.0
    %395 = vmatpush1.msra.mxu0 0.0
    %396 = vmatprep.subr.mxu0 0.0
    %397 = vmatpush1.msra.mxu0 0.0
    %398 = vmatprep.subr.mxu0 0.0
    %399 = vmatpush1.msra.mxu0 0.0
    %400 = vmatprep.subr.mxu0 0.0
    %401 = vmatpush1.msra.mxu0 0.0
    %402 = vmatprep.subr.mxu0 0.0
    %403 = vmatpush1.msra.mxu0 0.0
    %404 = vmatprep.subr.mxu0 0.0
    %405 = vmatpush1.msra.mxu0 0.0
    %406 = vmatprep.subr.mxu0 0.0
    %407 = vmatpush1.msra.mxu0 0.0
    %408 = vmatprep.subr.mxu0 0.0
    %409 = vmatpush1.msra.mxu0 0.0
    %410 = vmatprep.subr.mxu0 0.0
    %411 = vmatpush1.msra.mxu0 0.0
    %412 = vmatprep.subr.mxu0 0.0
    %413 = vmatpush1.msra.mxu0 0.0
    %414 = vmatprep.subr.mxu0 0.0
    %415 = vmatpush1.msra.mxu0 0.0
    %416 = vmatprep.subr.mxu0 0.0
    %417 = vmatpush1.msra.mxu0 0.0
    %418 = vmatprep.subr.mxu0 0.0
    %419 = vmatpush1.msra.mxu0 0.0
    %420 = vmatprep.subr.mxu0 0.0
    %421 = vmatpush1.msra.mxu0 0.0
    %422 = vmatprep.subr.mxu0 0.0
    %423 = vmatpush1.msra.mxu0 0.0
    %424 = vmatprep.subr.mxu0 0.0
    %425 = vmatpush1.msra.mxu0 0.0
    %426 = vmatprep.subr.mxu0 0.0
    %427 = vmatpush1.msra.mxu0 0.0
    %428 = vmatprep.mubr.f32.mxu0 0.0
    %429 = vmatmul.mubr.f32.gmra.mrb[0].mxu0 %v362
    %v430 = vpop.f32.mrb[0].mxu0
    %v431 = vadd.f32 %v358, %v430
    %v432 = vpop.f32.mrb[0].mxu0
    %433 = vdwg.mxu0
    %v434 = vtanh.pop %v431
    %vm435 = vcmask 64512
    %436 = vst.msk [vmem:[#allocation5] sm:$0xff] %vm435, %v434
    // Predicated region
    $region42: #{_policy_forward_impl.1} parent=1 // pred_check
      _
    $region43: #{_policy_forward_impl.1} parent=1 // pred_check_branch
      %438 = sbr.rel (0) target = $region45
    $region44: #{_policy_forward_impl.1} parent=1 // pred_region
      %s440 = ssub.s32 128, 32
      %441 = vsyncadd [#allocation4], %s440
      %s442 = sshll.u32 [#allocation5], 4
      %s443 = int_to_ptr.vmem [resolvable:$true] %s442
      %448 = dma.vmem_to_hbm [thread:$0]  %s443, 32, %s9, [#allocation4], 32, 32, 2
    $region45: #{_policy_forward_impl.1} parent=1 // pred_fallthru
      _
    // Predicated region
    $region46: #{_policy_forward_impl.1} parent=1 // pred_check
      _
    $region47: #{_policy_forward_impl.1} parent=1 // pred_check_branch
      %450 = sbr.rel (0) target = $region49
    $region48: #{_policy_forward_impl.1} parent=1 // pred_region
      %451 = dma.done [#allocation4], 128
    $region49: #{_policy_forward_impl.1} parent=1 // pred_fallthru
      _
    %452 = vsyncpa [#allocation3], 1
    %453 = vsyncpa [#allocation4], 1

</llo_original>
